<compile_context>
chip_gen: v7x
topology: tpu7x:2x2x1
jax: 0.10.0
libtpu: 0.0.40
codegen_flags: <defaults>
</compile_context>

<pallas_src>
import functools

import jax
import jax.numpy as jnp
from jax.experimental import pallas as pl
from jax.experimental.pallas import tpu as pltpu

EMBED_DIM = 320
NUM_DAILY, NUM_GENDER, NUM_EMBEL = 6, 5, 3
HEAD_OUT = NUM_DAILY + NUM_GENDER + NUM_EMBEL      # 14 real cols per head group
HEAD_TOTAL = 128                                   # single lane-dense output block
PATCH = 4
CP = 3 * PATCH * PATCH                             # 48 raw patch features
CP_PAD = ((CP + 1 + 7) // 8) * 8                   # +1 ones col (bias fold) -> 56
HEAD_ORDER = ("daily", "gender", "embel",
              "dist_daily", "dist_gender", "dist_embel")


# ---------------------------------------------------------------------------
# Per-generation configuration (VMEM budget, bf16 epilogue, megacore)
# ---------------------------------------------------------------------------
def _tpu_config():
    try:
        kind = jax.devices()[0].device_kind.lower()
    except Exception:  # pragma: no cover - defensive default
        kind = ""
    is_v7 = ("v7" in kind) or ("7x" in kind)
    has_bf16_vpu = is_v7 or ("v6" in kind)          # bf16 VALU/EUP: v6e/v7x only
    if is_v7:
        # v7x: 64 MiB physical VMEM per TC -> keep requests well under it.
        budget, limit_cap = 24 << 20, 40 << 20
    else:
        # v5e/v6e: 128 MiB VMEM -> bigger patch blocks amortize per-step cost.
        budget, limit_cap = 56 << 20, 96 << 20
    return {
        "two_cores": is_v7,
        "epilogue_dtype": jnp.bfloat16 if has_bf16_vpu else jnp.float32,
        "budget": budget,
        "limit_cap": limit_cap,
    }


def _vmem_need(bt, pt, cpp, d):
    return (2 * bt * pt * cpp * 2                    # double-buffered bf16 patches
            + 2 * cpp * d * 2                        # embed weight (bf16, 2 bufs)
            + 2 * (d * HEAD_TOTAL + HEAD_TOTAL) * 4  # head weight+bias (f32, 2 bufs)
            + 2 * bt * HEAD_TOTAL * 4                # output block (2 bufs)
            + bt * d * 4                             # f32 acc scratch
            + bt * pt * d * 4)                       # fused matmul/GELU intermediate


def _pick_bt(b, two_cores):
    cap = 64
    if two_cores and b >= 16:
        # Guarantee >=2 B-blocks so both v7x TensorCores get work.
        cap = min(cap, max(8, (b // 2) // 8 * 8))
    if b % 8 == 0:
        return max(d for d in range(8, cap + 1, 8) if b % d == 0)
    # Odd batch: the output block must span the full batch dim (8,128 rule);
    # pt is then shrunk by the VMEM budget instead.
    return b


def _pick_pt(p, bt, cpp, d, budget):
    if p % 8 != 0:
        return p
    unit = 16 if p % 16 == 0 else 8                  # bf16 sublane packing
    best = unit
    for cand in range(unit, min(p, 512) + 1, unit):
        if p % cand == 0 and _vmem_need(bt, cand, cpp, d) <= budget:
            best = cand
    return best


# ---------------------------------------------------------------------------
# Fused kernel: patch-embed (bias folded) + sigmoid-GELU + mean-pool + heads
# ---------------------------------------------------------------------------
def _fast_gelu(x):
    # x * sigmoid(1.702 x): EUP exp (+ EUP approx reciprocal for f32) and ~3
    # VPU ops, instead of the tanh GELU chain that saturates the VALU slot.
    z = jnp.exp(x * jnp.asarray(-1.702, x.dtype))
    one = jnp.asarray(1.0, x.dtype)
    if x.dtype == jnp.float32:
        return x * pl.reciprocal(one + z, approx=True)
    return x / (one + z)                             # bf16 epilogue (v6e/v7x)


def _fused_kernel(patches_ref, w_embed_ref, w_heads_ref, b_heads_ref,
                  out_ref, acc_ref, *, inv_p, epilogue_dtype):
    pi = pl.program_id(1)                            # patch-block reduction axis

    @pl.when(pi == 0)
    def _():
        acc_ref[...] = jnp.zeros_like(acc_ref)

    bt, pt, cp = patches_ref.shape
    # Collapse (bt, pt): one large-M 2-D bf16 matmul.  The embed bias rides in
    # w_embed via the ones column of the patch features, so the epilogue is
    # just GELU + partial sum (no broadcast add, no extra temporaries).
    x = patches_ref[...].reshape(bt * pt, cp)
    h = jnp.dot(x, w_embed_ref[...], preferred_element_type=epilogue_dtype)
    g = _fast_gelu(h)
    # f32 partial sum over this patch block; the mean is finalized at the end.
    acc_ref[...] += jnp.sum(g.reshape(bt, pt, -1), axis=1, dtype=jnp.float32)

    @pl.when(pi == pl.num_programs(1) - 1)
    def _():
        feat = acc_ref[...] * inv_p                                  # mean over P
        y = jnp.dot(feat, w_heads_ref[...],
                    preferred_element_type=jnp.float32)              # f32 heads
        out_ref[...] = y + b_heads_ref[...]                          # [bt, 128]


def tiny_vit_fused(patches, w_embed_ext, w_heads, b_heads, *, pt=None, bt=None):
    B, P, Cpp = patches.shape
    D = w_embed_ext.shape[1]
    cfg = _tpu_config()
    if bt is None:
        bt = _pick_bt(B, cfg["two_cores"])
    if pt is None:
        pt = _pick_pt(P, bt, Cpp, D, cfg["budget"])
    assert B % bt == 0 and P % pt == 0

    w_embed_ext = w_embed_ext.astype(jnp.bfloat16)   # patches already bf16

    need = _vmem_need(bt, pt, Cpp, D)
    vmem_limit = int(min(cfg["limit_cap"], max(32 << 20, int(need * 1.5))))

    flops = 2 * B * P * Cpp * D + 2 * B * D * HEAD_TOTAL
    bytes_accessed = (B * P * Cpp * 2 + Cpp * D * 2 +
                      D * HEAD_TOTAL * 4 + HEAD_TOTAL * 4 + B * HEAD_TOTAL * 4)

    kernel = functools.partial(_fused_kernel, inv_p=1.0 / P,
                               epilogue_dtype=cfg["epilogue_dtype"])
    return pl.pallas_call(
        kernel,
        out_shape=jax.ShapeDtypeStruct((B, HEAD_TOTAL), jnp.float32),
        grid=(B // bt, P // pt),
        in_specs=[
            pl.BlockSpec((bt, pt, Cpp), lambda bi, pi: (bi, pi, 0)),
            pl.BlockSpec((Cpp, D), lambda bi, pi: (0, 0)),
            pl.BlockSpec((D, HEAD_TOTAL), lambda bi, pi: (0, 0)),
            pl.BlockSpec((1, HEAD_TOTAL), lambda bi, pi: (0, 0)),
        ],
        out_specs=pl.BlockSpec((bt, HEAD_TOTAL), lambda bi, pi: (bi, 0)),
        scratch_shapes=[pltpu.VMEM((bt, D), jnp.float32)],
        compiler_params=pltpu.CompilerParams(
            dimension_semantics=("parallel", "arbitrary"),
            vmem_limit_bytes=vmem_limit),
        cost_estimate=pl.CostEstimate(
            flops=flops, transcendentals=B * P * D,
            bytes_accessed=bytes_accessed),
    )(patches, w_embed_ext, w_heads, b_heads)


# ---------------------------------------------------------------------------
# Parameter construction (deterministic, PyTorch nn.Linear-style init)
# ---------------------------------------------------------------------------
def _linear_params(key, fan_in, fan_out):
    kw, kb = jax.random.split(key)
    bound = 1.0 / jnp.sqrt(jnp.float32(fan_in))
    w = jax.random.uniform(kw, (fan_in, fan_out), jnp.float32, -bound, bound)
    b = jax.random.uniform(kb, (fan_out,), jnp.float32, -bound, bound)
    return w, b


def make_params(key):
    keys = jax.random.split(key, 7)
    w_embed, b_embed = _linear_params(keys[0], CP, EMBED_DIM)
    # Fold the embed bias into the weight (ones column appended to patches).
    w_embed_ext = jnp.concatenate(
        [w_embed, b_embed.reshape(1, EMBED_DIM),
         jnp.zeros((CP_PAD - CP - 1, EMBED_DIM), jnp.float32)], axis=0)

    heads = {}
    for name, kk, n in (("daily", keys[1], NUM_DAILY),
                        ("gender", keys[2], NUM_GENDER),
                        ("embel", keys[3], NUM_EMBEL),
                        ("dist_daily", keys[4], NUM_DAILY),
                        ("dist_gender", keys[5], NUM_GENDER),
                        ("dist_embel", keys[6], NUM_EMBEL)):
        heads[name] = _linear_params(kk, EMBED_DIM, n)

    # Pack all 6 heads into ONE lane-dense 128-wide block:
    #   cols 0..13 = main (daily|gender|embel), cols 14..27 = distillation.
    w_all = jnp.concatenate([heads[n][0] for n in HEAD_ORDER], axis=1)
    b_all = jnp.concatenate([heads[n][1] for n in HEAD_ORDER], axis=0)
    w_heads = jnp.pad(w_all, ((0, 0), (0, HEAD_TOTAL - 2 * HEAD_OUT)))
    b_heads = jnp.pad(b_all, (0, HEAD_TOTAL - 2 * HEAD_OUT)).reshape(1, HEAD_TOTAL)

    return {"w_embed_ext": w_embed_ext, "w_heads": w_heads, "b_heads": b_heads}


# ---------------------------------------------------------------------------
# Forward pass (mirrors TinyViT.forward)
# ---------------------------------------------------------------------------
def _extract_patches(img_nchw):
    # NCHW -> [B, P, CP_PAD] bf16 with a ones column at index CP (folded bias).
    # The bf16 cast happens BEFORE the im2col so the materialized HBM copy is
    # half-width.
    B, C, H, W = img_nchw.shape
    assert C * PATCH * PATCH == CP
    x = img_nchw.astype(jnp.bfloat16)
    x = x.reshape(B, C, H // PATCH, PATCH, W // PATCH, PATCH)
    x = jnp.transpose(x, (0, 2, 4, 1, 3, 5))
    P = (H // PATCH) * (W // PATCH)
    x = x.reshape(B, P, CP)
    ones = jnp.ones((B, P, 1), jnp.bfloat16)
    pad = jnp.zeros((B, P, CP_PAD - CP - 1), jnp.bfloat16)
    return jnp.concatenate([x, ones, pad], axis=2)


def _split_heads(t):
    return (t[:, :NUM_DAILY],
            t[:, NUM_DAILY:NUM_DAILY + NUM_GENDER],
            t[:, NUM_DAILY + NUM_GENDER:HEAD_OUT])


def _combine(y_main, y_dist, distillation, training):
    m = _split_heads(y_main)
    if not distillation:
        return m
    d = _split_heads(y_dist)
    if training:
        return tuple((a, b) for a, b in zip(m, d))
    return tuple((a + b) / 2 for a, b in zip(m, d))


@functools.partial(jax.jit,
                   static_argnames=("distillation", "training", "pt", "bt"))
def tiny_vit_forward(params, image_nchw, distillation=True, training=False,
                     pt=None, bt=None):
    patches = _extract_patches(image_nchw)
    y = tiny_vit_fused(patches, params["w_embed_ext"], params["w_heads"],
                       params["b_heads"], pt=pt, bt=bt)
    return _combine(y[:, :HEAD_OUT], y[:, HEAD_OUT:2 * HEAD_OUT],
                    distillation, training)


def _reference_forward(params, image_nchw, distillation=True, training=False):
    # Pure-jnp reference of the same math (exact sigmoid-GELU, f32 everywhere).
    patches = _extract_patches(image_nchw).astype(jnp.float32)
    w = params["w_embed_ext"].astype(jnp.bfloat16).astype(jnp.float32)
    h = jnp.einsum("bpc,cd->bpd", patches, w)
    g = h * jax.nn.sigmoid(1.702 * h)
    feat = g.mean(axis=1)
    y = feat @ params["w_heads"] + params["b_heads"]
    return _combine(y[:, :HEAD_OUT], y[:, HEAD_OUT:2 * HEAD_OUT],
                    distillation, training)


if __name__ == "__main__":
    import numpy as np

    key = jax.random.PRNGKey(0)
    k_param, k_img = jax.random.split(key)
    params = make_params(k_param)

    B, C, H, W = 2, 3, 32, 32      # P = 64 patches of 4x4, CP = 48
    image = jax.random.normal(k_img, (B, C, H, W), jnp.float32)
    x = {"image": image}           # same dict interface as the PyTorch module

    # Auto tiling (single reduction step at this tiny size).
    out = tiny_vit_forward(params, x["image"], distillation=True, training=False)
    # pt=16 -> 4-step P reduction: exercises the pl.when init/finalize path.
    out_tiled = tiny_vit_forward(params, x["image"], distillation=True,
                                 training=False, pt=16)
    jax.block_until_ready((out, out_tiled))

    out_daily, out_gender, out_embel = out
    assert out_daily.shape == (B, NUM_DAILY)
    assert out_gender.shape == (B, NUM_GENDER)
    assert out_embel.shape == (B, NUM_EMBEL)

    # Tiled vs un-tiled reduction must agree; both must agree with a pure-jnp
    # reference (loose tol covers approx reciprocal / optional bf16 epilogue).
    for a, b in zip(out, out_tiled):
        np.testing.assert_allclose(np.asarray(a), np.asarray(b),
                                   rtol=2e-2, atol=2e-3)
    ref = _reference_forward(params, x["image"], distillation=True,
                             training=False)
    for a, b in zip(out, ref):
        np.testing.assert_allclose(np.asarray(a), np.asarray(b),
                                   rtol=5e-2, atol=5e-2)

    print("KERNEL_OK")
</pallas_src>

<mosaic_0001>
module attributes {stable_mosaic.version = 11 : i64} {
  func.func @_fused_kernel(%arg0: i32, %arg1: i32, %arg2: memref<2x64x56xbf16, #tpu.memory_space<vmem>>, %arg3: memref<56x320xbf16, #tpu.memory_space<vmem>>, %arg4: memref<320x128xf32, #tpu.memory_space<vmem>>, %arg5: memref<1x128xf32, #tpu.memory_space<vmem>>, %arg6: memref<2x128xf32, #tpu.memory_space<vmem>>, %arg7: memref<2x320xf32, #tpu.memory_space<vmem>>) attributes {dimension_semantics = [#tpu.dimension_semantics<parallel>, #tpu.dimension_semantics<arbitrary>], iteration_bounds = array<i64: 1, 1>, scalar_prefetch = 0 : i64, scratch_operands = 1 : i64, tpu.core_type = #tpu.core_type<tc>, window_params = [{transform_indices = @transform_0, window_bounds = array<i64: 2, 64, 56>}, {pipeline_mode = #tpu.pipeline_mode<synchronous>, transform_indices = @transform_1, window_bounds = array<i64: 56, 320>}, {pipeline_mode = #tpu.pipeline_mode<synchronous>, transform_indices = @transform_2, window_bounds = array<i64: 320, 128>}, {pipeline_mode = #tpu.pipeline_mode<synchronous>, transform_indices = @transform_3, window_bounds = array<i64: 1, 128>}, {transform_indices = @transform_4, window_bounds = array<i64: 2, 128>}]} {
    %c0_i32 = arith.constant 0 : i32
    %0 = arith.cmpi eq, %arg1, %c0_i32 : i32
    %1 = arith.extui %0 : i1 to i32
    %c0_i32_0 = arith.constant 0 : i32
    %2 = arith.cmpi ne, %1, %c0_i32_0 : i32
    scf.if %2 {
      %cst_14 = arith.constant 0.000000e+00 : f32
      %22 = vector.broadcast %cst_14 : f32 to vector<2x320xf32>
      %c0_15 = arith.constant 0 : index
      %c0_16 = arith.constant 0 : index
      %23 = vector.load %arg7[%c0_15, %c0_16] : memref<2x320xf32, #tpu.memory_space<vmem>>, vector<2x320xf32>
      tpu.vector_store %arg7[%c0_15, %c0_16], %22 {strides = array<i32>} : memref<2x320xf32, #tpu.memory_space<vmem>>, vector<2x320xf32>,
    } else {
    }
    %c0 = arith.constant 0 : index
    %c0_1 = arith.constant 0 : index
    %c0_2 = arith.constant 0 : index
    %3 = vector.load %arg2[%c0, %c0_1, %c0_2] : memref<2x64x56xbf16, #tpu.memory_space<vmem>>, vector<2x64x56xbf16>
    %4 = vector.shape_cast %3 : vector<2x64x56xbf16> to vector<128x56xbf16>
    %c0_3 = arith.constant 0 : index
    %c0_4 = arith.constant 0 : index
    %5 = vector.load %arg3[%c0_3, %c0_4] : memref<56x320xbf16, #tpu.memory_space<vmem>>, vector<56x320xbf16>
    %cst = arith.constant dense<0.000000e+00> : vector<128x320xf32>
    %6 = tpu.matmul %4, %5, %cst {dimension_numbers = #tpu.dot_dimension_numbers<[1], [0], [0], [1], [0, 0, 1, 1], [], []>} : vector<128x56xbf16>, vector<56x320xbf16>, vector<128x320xf32> -> vector<128x320xf32>
    %cst_5 = arith.constant -1.702000e+00 : f32
    %7 = vector.broadcast %cst_5 : f32 to vector<128x320xf32>
    %8 = arith.mulf %6, %7 : vector<128x320xf32>
    %9 = math.exp %8 : vector<128x320xf32>
    %cst_6 = arith.constant 1.000000e+00 : f32
    %10 = vector.broadcast %cst_6 : f32 to vector<128x320xf32>
    %11 = arith.addf %10, %9 : vector<128x320xf32>
    %12 = tpu.reciprocal %11 {approx = true} : vector<128x320xf32> -> vector<128x320xf32>
    %13 = arith.mulf %6, %12 : vector<128x320xf32>
    %c0_7 = arith.constant 0 : index
    %c0_8 = arith.constant 0 : index
    %14 = vector.load %arg7[%c0_7, %c0_8] : memref<2x320xf32, #tpu.memory_space<vmem>>, vector<2x320xf32>
    %15 = vector.shape_cast %13 : vector<128x320xf32> to vector<2x64x320xf32>
    %cst_9 = arith.constant dense<0.000000e+00> : vector<2x320xf32>
    %16 = vector.multi_reduction <add>, %15, %cst_9 [1] : vector<2x64x320xf32> to vector<2x320xf32>
    %17 = arith.addf %14, %16 : vector<2x320xf32>
    %c0_10 = arith.constant 0 : index
    %c0_11 = arith.constant 0 : index
    %18 = vector.load %arg7[%c0_10, %c0_11] : memref<2x320xf32, #tpu.memory_space<vmem>>, vector<2x320xf32>
    tpu.vector_store %arg7[%c0_10, %c0_11], %17 {strides = array<i32>} : memref<2x320xf32, #tpu.memory_space<vmem>>, vector<2x320xf32>,
    %c0_i32_12 = arith.constant 0 : i32
    %19 = arith.cmpi eq, %arg1, %c0_i32_12 : i32
    %20 = arith.extui %19 : i1 to i32
    %c0_i32_13 = arith.constant 0 : i32
    %21 = arith.cmpi ne, %20, %c0_i32_13 : i32
    scf.if %21 {
      %c0_14 = arith.constant 0 : index
      %c0_15 = arith.constant 0 : index
      %22 = vector.load %arg7[%c0_14, %c0_15] : memref<2x320xf32, #tpu.memory_space<vmem>>, vector<2x320xf32>
      %cst_16 = arith.constant 1.562500e-02 : f32
      %23 = vector.broadcast %cst_16 : f32 to vector<2x320xf32>
      %24 = arith.mulf %22, %23 : vector<2x320xf32>
      %c0_17 = arith.constant 0 : index
      %c0_18 = arith.constant 0 : index
      %25 = vector.load %arg4[%c0_17, %c0_18] : memref<320x128xf32, #tpu.memory_space<vmem>>, vector<320x128xf32>
      %cst_19 = arith.constant dense<0.000000e+00> : vector<2x128xf32>
      %26 = tpu.matmul %24, %25, %cst_19 {dimension_numbers = #tpu.dot_dimension_numbers<[1], [0], [0], [1], [0, 0, 1, 1], [], []>} : vector<2x320xf32>, vector<320x128xf32>, vector<2x128xf32> -> vector<2x128xf32>
      %c0_20 = arith.constant 0 : index
      %c0_21 = arith.constant 0 : index
      %27 = vector.load %arg5[%c0_20, %c0_21] : memref<1x128xf32, #tpu.memory_space<vmem>>, vector<1x128xf32>
      %28 = vector.broadcast %27 : vector<1x128xf32> to vector<2x128xf32>
      %29 = arith.addf %26, %28 : vector<2x128xf32>
      %c0_22 = arith.constant 0 : index
      %c0_23 = arith.constant 0 : index
      %30 = vector.load %arg6[%c0_22, %c0_23] : memref<2x128xf32, #tpu.memory_space<vmem>>, vector<2x128xf32>
      tpu.vector_store %arg6[%c0_22, %c0_23], %29 {strides = array<i32>} : memref<2x128xf32, #tpu.memory_space<vmem>>, vector<2x128xf32>,
    } else {
    }
    return
  }
  func.func @transform_0(%arg0: i32, %arg1: i32) -> (i32, i32, i32) {
    %c0_i32 = arith.constant 0 : i32
    %c0_i32_0 = arith.constant 0 : i32
    return %arg0, %arg1, %c0_i32 : i32, i32, i32
  }
  func.func @transform_1(%arg0: i32, %arg1: i32) -> (i32, i32) {
    %c0_i32 = arith.constant 0 : i32
    %c0_i32_0 = arith.constant 0 : i32
    %c0_i32_1 = arith.constant 0 : i32
    return %c0_i32, %c0_i32_0 : i32, i32
  }
  func.func @transform_2(%arg0: i32, %arg1: i32) -> (i32, i32) {
    %c0_i32 = arith.constant 0 : i32
    %c0_i32_0 = arith.constant 0 : i32
    %c0_i32_1 = arith.constant 0 : i32
    return %c0_i32, %c0_i32_0 : i32, i32
  }
  func.func @transform_3(%arg0: i32, %arg1: i32) -> (i32, i32) {
    %c0_i32 = arith.constant 0 : i32
    %c0_i32_0 = arith.constant 0 : i32
    %c0_i32_1 = arith.constant 0 : i32
    return %c0_i32, %c0_i32_0 : i32, i32
  }
  func.func @transform_4(%arg0: i32, %arg1: i32) -> (i32, i32) {
    %c0_i32 = arith.constant 0 : i32
    %c0_i32_0 = arith.constant 0 : i32
    return %arg0, %c0_i32 : i32, i32
  }
}

</mosaic_0001>

<llo_original>
// kernel: tiny_vit_forward.1
$region0: #{tiny_vit_forward.1}
  #allocation0 [shape = 'u32[]', space=smem, size = 0x4, offset = 0x4, fixed_abs, tag = 'smem constant byte address 0x4 - core index']
  #allocation1 [shape = 'u32[144,128]{1,0:T(1,128)}', space=vmem, size = 0x12000, scoped, tag = 'internal scratch']
  #allocation2 [shape = 'f32[2,320]{1,0:T(2,128)}', space=vmem, size = 0xc00, scoped, tag = 'scratch operand']
  %s0 = inlined_call_operand.vmem [shape: bf16[2,64,56], index: 0, kind: input, shape index: {}]
  %s1 = inlined_call_operand.vmem [shape: bf16[56,320], index: 1, kind: input, shape index: {}]
  %s2 = inlined_call_operand.vmem [shape: f32[320,128], index: 2, kind: input, shape index: {}]
  %s3 = inlined_call_operand.vmem [shape: f32[1,128], index: 3, kind: input, shape index: {}]
  %s4 = inlined_call_operand.vmem [shape: f32[2,128], index: 4, kind: output, shape index: {}]
  %s5 = sld [smem:[#allocation0]]
  $region34: #{tiny_vit_forward.1} parent=0
    _
  %s7 = ssub.s32 1, %s5
  %s8 = scalar_select 0, %s7, %s5
  // Predicated region
  $region2: #{tiny_vit_forward.1} parent=0 // pred_check
    _
  $region3: #{tiny_vit_forward.1} parent=0 // pred_check_branch
    %10 = sbr.rel (0) target = $region5
  $region4: #{tiny_vit_forward.1} parent=0 // pred_region
    _
  $region5: #{tiny_vit_forward.1} parent=0 // pred_fallthru
    _
  // Predicated region
  $region6: #{tiny_vit_forward.1} parent=0 // pred_check
    _
  $region7: #{tiny_vit_forward.1} parent=0 // pred_check_branch
    %12 = sbr.rel (0) target = $region9
  $region8: #{tiny_vit_forward.1} parent=0 // pred_region
    _
  $region9: #{tiny_vit_forward.1} parent=0 // pred_fallthru
    _
  // Predicated region
  $region10: #{tiny_vit_forward.1} parent=0 // pred_check
    _
  $region11: #{tiny_vit_forward.1} parent=0 // pred_check_branch
    %14 = sbr.rel (0) target = $region13
  $region12: #{tiny_vit_forward.1} parent=0 // pred_region
    _
  $region13: #{tiny_vit_forward.1} parent=0 // pred_fallthru
    _
  // Predicated region
  $region14: #{tiny_vit_forward.1} parent=0 // pred_check
    _
  $region15: #{tiny_vit_forward.1} parent=0 // pred_check_branch
    %16 = sbr.rel (0) target = $region17
  $region16: #{tiny_vit_forward.1} parent=0 // pred_region
    _
  $region17: #{tiny_vit_forward.1} parent=0 // pred_fallthru
    _
  %p18 = scmp.eq.s32.totalorder 0, 0
  // Predicated region
  $region18: #{tiny_vit_forward.1} parent=0 // pred_check
    %p19 = pneg %p18
  $region19: #{tiny_vit_forward.1} parent=0 // pred_check_branch
    %21 = sbr.rel (%p19) target = $region21
  $region20: #{tiny_vit_forward.1} parent=0 // pred_region
    %vm22 = vcmask 1041408
    %vm23 = vcmask 1043458
    %vm24 = vmor %vm23, %vm22
    %vm25 = vcmask 521220
    %vm26 = vmor %vm25, %vm24
    %27 = vst.msk [vmem:[#allocation2] sm:$0x3f] %vm26, 0.0
  $region21: #{tiny_vit_forward.1} parent=0 // pred_fallthru
    _
  %v28 = vld [vmem:[%s0] sm:$0xf]
  %v29 = vld [vmem:[%s0 + $0x4] sm:$0xf]
  %v30 = vld [vmem:[%s0 + $0x8] sm:$0xf]
  %v31 = vld [vmem:[%s0 + $0xc] sm:$0xf]
  %v32 = vld [vmem:[%s0 + $0x10] sm:$0xf]
  %v33 = vld [vmem:[%s0 + $0x14] sm:$0xf]
  %v34 = vld [vmem:[%s0 + $0x18] sm:$0xf]
  %v35 = vld [vmem:[%s0 + $0x1c] sm:$0xf]
  %v36 = vld [vmem:[%s0 + $0x20] sm:$0xf]
  %v37 = vld [vmem:[%s0 + $0x24] sm:$0xf]
  %v38 = vld [vmem:[%s0 + $0x28] sm:$0xf]
  %v39 = vld [vmem:[%s0 + $0x2c] sm:$0xf]
  %v40 = vld [vmem:[%s0 + $0x30] sm:$0xf]
  %v41 = vld [vmem:[%s0 + $0x34] sm:$0xf]
  %v42 = vld [vmem:[%s0 + $0x38] sm:$0xf]
  %v43 = vld [vmem:[%s0 + $0x3c] sm:$0xf]
  %v44 = vld [vmem:[%s1] sm:$0xff]
  %v45 = vld [vmem:[%s1 + $0x8] sm:$0xf]
  %v46 = vld [vmem:[%s1 + $0xc] sm:$0xff]
  %v47 = vld [vmem:[%s1 + $0x14] sm:$0xf]
  %v48 = vld [vmem:[%s1 + $0x18] sm:$0xff]
  %v49 = vld [vmem:[%s1 + $0x20] sm:$0xf]
  %v50 = vld [vmem:[%s1 + $0x24] sm:$0xff]
  %v51 = vld [vmem:[%s1 + $0x2c] sm:$0xf]
  %v52 = vld [vmem:[%s1 + $0x30] sm:$0xff]
  %v53 = vld [vmem:[%s1 + $0x38] sm:$0xf]
  %v54 = vld [vmem:[%s1 + $0x3c] sm:$0xff]
  %v55 = vld [vmem:[%s1 + $0x44] sm:$0xf]
  %v56 = vld [vmem:[%s1 + $0x48] sm:$0xff]
  %v57 = vld [vmem:[%s1 + $0x50] sm:$0xf]
  %v74 = vunpack.c.l.b16 %v28
  %v75 = vunpack.c.l.b16 %v29
  %v76 = vunpack.c.l.b16 %v30
  %v77 = vunpack.c.l.b16 %v31
  %v78 = vunpack.c.l.b16 %v32
  %v79 = vunpack.c.l.b16 %v33
  %v80 = vunpack.c.l.b16 %v34
  %v81 = vunpack.c.l.b16 %v35
  %v82 = vunpack.c.l.b16 %v36
  %v83 = vunpack.c.l.b16 %v37
  %v84 = vunpack.c.l.b16 %v38
  %v85 = vunpack.c.l.b16 %v39
  %v86 = vunpack.c.l.b16 %v40
  %v87 = vunpack.c.l.b16 %v41
  %v88 = vunpack.c.l.b16 %v42
  %v89 = vunpack.c.l.b16 %v43
  %v90 = vpack.c.b16 %v75, %v74
  %v91 = vpack.c.b16 %v77, %v76
  %v92 = vpack.c.b16 %v79, %v78
  %v93 = vpack.c.b16 %v81, %v80
  %v94 = vpack.c.b16 %v83, %v82
  %v95 = vpack.c.b16 %v85, %v84
  %v96 = vpack.c.b16 %v87, %v86
  %v97 = vpack.c.b16 %v89, %v88
  %v112 = vunpack.c.l.b16 %v44
  %v113 = vunpack.c.h.b16 %v44
  %v114 = vunpack.c.l.b16 %v45
  %v115 = vunpack.c.l.b16 %v46
  %v116 = vunpack.c.h.b16 %v46
  %v117 = vunpack.c.l.b16 %v47
  %v118 = vunpack.c.l.b16 %v48
  %v119 = vunpack.c.h.b16 %v48
  %v120 = vunpack.c.l.b16 %v49
  %v121 = vunpack.c.l.b16 %v50
  %v122 = vunpack.c.h.b16 %v50
  %v123 = vunpack.c.l.b16 %v51
  %v124 = vunpack.c.l.b16 %v52
  %v125 = vunpack.c.h.b16 %v52
  %v126 = vunpack.c.l.b16 %v53
  %v127 = vunpack.c.l.b16 %v54
  %v128 = vunpack.c.h.b16 %v54
  %v129 = vunpack.c.l.b16 %v55
  %v130 = vunpack.c.l.b16 %v56
  %v131 = vunpack.c.h.b16 %v56
  %v132 = vunpack.c.l.b16 %v57
  %v133 = vpack.c.b16 %v115, %v112
  %v134 = vpack.c.b16 %v116, %v113
  %v135 = vpack.c.b16 %v117, %v114
  %v136 = vpack.c.b16 %v121, %v118
  %v137 = vpack.c.b16 %v122, %v119
  %v138 = vpack.c.b16 %v123, %v120
  %v139 = vpack.c.b16 %v127, %v124
  %v140 = vpack.c.b16 %v128, %v125
  %v141 = vpack.c.b16 %v129, %v126
  %v142 = vpack.c.b16 %v130, %v130
  %v143 = vpack.c.b16 %v131, %v131
  %v144 = vpack.c.b16 %v132, %v132
  %vm154 = vcmask 457728
  %v156 = vsel %vm154, %v90, 0
  %v159 = vsel %vm154, %v91, 0
  %v162 = vsel %vm154, %v92, 0
  %v165 = vsel %vm154, %v93, 0
  %v168 = vsel %vm154, %v94, 0
  %v171 = vsel %vm154, %v95, 0
  %v174 = vsel %vm154, %v96, 0
  %v177 = vsel %vm154, %v97, 0
  %vm179 = vcmask 1043456
  %v181 = vsel %vm179, %v142, 0
  %v184 = vsel %vm179, %v143, 0
  %v187 = vsel %vm179, %v144, 0
  %189 = vmatprep.subr.bf16.mxu0 %v134
  %190 = vmatpush1.bf16.msra.mxu0 %v133
  %191 = vmatprep.subr.bf16.mxu0 %v137
  %192 = vmatpush1.bf16.msra.mxu0 %v136
  %193 = vmatprep.subr.bf16.mxu0 %v140
  %194 = vmatpush1.bf16.msra.mxu0 %v139
  %195 = vmatprep.subr.bf16.mxu0 %v184
  %196 = vmatpush1.bf16.msra.mxu0 %v181
  %197 = vmatprep.subr.bf16.mxu0 0
  %198 = vmatpush1.bf16.msra.mxu0 0
  %199 = vmatprep.subr.bf16.mxu0 0
  %200 = vmatpush1.bf16.msra.mxu0 0
  %201 = vmatprep.subr.bf16.mxu0 0
  %202 = vmatpush1.bf16.msra.mxu0 0
  %203 = vmatprep.subr.bf16.mxu0 0
  %204 = vmatpush1.bf16.msra.mxu0 0
  %205 = vmatprep.subr.bf16.mxu0 0
  %206 = vmatpush1.bf16.msra.mxu0 0
  %207 = vmatprep.subr.bf16.mxu0 0
  %208 = vmatpush1.bf16.msra.mxu0 0
  %209 = vmatprep.subr.bf16.mxu0 0
  %210 = vmatpush1.bf16.msra.mxu0 0
  %211 = vmatprep.subr.bf16.mxu0 0
  %212 = vmatpush1.bf16.msra.mxu0 0
  %213 = vmatprep.subr.bf16.mxu0 0
  %214 = vmatpush1.bf16.msra.mxu0 0
  %215 = vmatprep.subr.bf16.mxu0 0
  %216 = vmatpush1.bf16.msra.mxu0 0
  %217 = vmatprep.subr.bf16.mxu0 0
  %218 = vmatpush1.bf16.msra.mxu0 0
  %219 = vmatprep.subr.bf16.mxu0 0
  %220 = vmatpush1.bf16.msra.mxu0 0
  %221 = vmatprep.mubr.bf16.mxu0 0
  %222 = vmatmul.mubr.bf16.gmra.mrb[0].mxu0 %v156
  %v223 = vpop.f32.mrb[0].mxu0
  %v224 = vadd.f32 0.0, %v223
  %v225 = vpop.f32.mrb[0].mxu0
  %v226 = vadd.f32 0.0, %v225
  %v227 = vpop.f32.mrb[0].mxu0
  %v228 = vadd.f32 0.0, %v227
  %v229 = vpop.f32.mrb[0].mxu0
  %v230 = vadd.f32 0.0, %v229
  %231 = vmatprep.mubr.bf16.mxu0 0
  %232 = vmatmul.mubr.bf16.gmra.mrb[0].mxu0 %v159
  %v233 = vpop.f32.mrb[0].mxu0
  %v234 = vadd.f32 0.0, %v233
  %v235 = vpop.f32.mrb[0].mxu0
  %v236 = vadd.f32 0.0, %v235
  %v237 = vpop.f32.mrb[0].mxu0
  %v238 = vadd.f32 0.0, %v237
  %v239 = vpop.f32.mrb[0].mxu0
  %v240 = vadd.f32 0.0, %v239
  %241 = vmatprep.mubr.bf16.mxu0 0
  %242 = vmatmul.mubr.bf16.gmra.mrb[0].mxu0 %v162
  %v243 = vpop.f32.mrb[0].mxu0
  %v244 = vadd.f32 0.0, %v243
  %v245 = vpop.f32.mrb[0].mxu0
  %v246 = vadd.f32 0.0, %v245
  %v247 = vpop.f32.mrb[0].mxu0
  %v248 = vadd.f32 0.0, %v247
  %v249 = vpop.f32.mrb[0].mxu0
  %v250 = vadd.f32 0.0, %v249
  %251 = vmatprep.mubr.bf16.mxu0 0
  %252 = vmatmul.mubr.bf16.gmra.mrb[0].mxu0 %v165
  %v253 = vpop.f32.mrb[0].mxu0
  %v254 = vadd.f32 0.0, %v253
  %v255 = vpop.f32.mrb[0].mxu0
  %v256 = vadd.f32 0.0, %v255
  %v257 = vpop.f32.mrb[0].mxu0
  %v258 = vadd.f32 0.0, %v257
  %v259 = vpop.f32.mrb[0].mxu0
  %v260 = vadd.f32 0.0, %v259
  %261 = vmatprep.mubr.bf16.mxu0 0
  %262 = vmatmul.mubr.bf16.gmra.mrb[0].mxu0 %v168
  %v263 = vpop.f32.mrb[0].mxu0
  %v264 = vadd.f32 0.0, %v263
  %v265 = vpop.f32.mrb[0].mxu0
  %v266 = vadd.f32 0.0, %v265
  %v267 = vpop.f32.mrb[0].mxu0
  %v268 = vadd.f32 0.0, %v267
  %v269 = vpop.f32.mrb[0].mxu0
  %v270 = vadd.f32 0.0, %v269
  %271 = vmatprep.mubr.bf16.mxu0 0
  %272 = vmatmul.mubr.bf16.gmra.mrb[0].mxu0 %v171
  %v273 = vpop.f32.mrb[0].mxu0
  %v274 = vadd.f32 0.0, %v273
  %v275 = vpop.f32.mrb[0].mxu0
  %v276 = vadd.f32 0.0, %v275
  %v277 = vpop.f32.mrb[0].mxu0
  %v278 = vadd.f32 0.0, %v277
  %v279 = vpop.f32.mrb[0].mxu0
  %v280 = vadd.f32 0.0, %v279
  %281 = vmatprep.mubr.bf16.mxu0 0
  %282 = vmatmul.mubr.bf16.gmra.mrb[0].mxu0 %v174
  %v283 = vpop.f32.mrb[0].mxu0
  %v284 = vadd.f32 0.0, %v283
  %v285 = vpop.f32.mrb[0].mxu0
  %v286 = vadd.f32 0.0, %v285
  %v287 = vpop.f32.mrb[0].mxu0
  %v288 = vadd.f32 0.0, %v287
  %v289 = vpop.f32.mrb[0].mxu0
  %v290 = vadd.f32 0.0, %v289
  %291 = vmatprep.mubr.bf16.mxu0 0
  %292 = vmatmul.mubr.bf16.gmra.mrb[0].mxu0 %v177
  %v293 = vpop.f32.mrb[0].mxu0
  %v294 = vadd.f32 0.0, %v293
  %v295 = vpop.f32.mrb[0].mxu0
  %v296 = vadd.f32 0.0, %v295
  %v297 = vpop.f32.mrb[0].mxu0
  %v298 = vadd.f32 0.0, %v297
  %v299 = vpop.f32.mrb[0].mxu0
  %v300 = vadd.f32 0.0, %v299
  %301 = vdwg.mxu0
  %302 = vmatprep.subr.bf16.mxu0 0
  %303 = vmatpush1.bf16.msra.mxu0 %v135
  %304 = vmatprep.subr.bf16.mxu0 0
  %305 = vmatpush1.bf16.msra.mxu0 %v138
  %306 = vmatprep.subr.bf16.mxu0 0
  %307 = vmatpush1.bf16.msra.mxu0 %v141
  %308 = vmatprep.subr.bf16.mxu0 0
  %309 = vmatpush1.bf16.msra.mxu0 %v187
  %310 = vmatprep.subr.bf16.mxu0 0
  %311 = vmatpush1.bf16.msra.mxu0 0
  %312 = vmatprep.subr.bf16.mxu0 0
  %313 = vmatpush1.bf16.msra.mxu0 0
  %314 = vmatprep.subr.bf16.mxu0 0
  %315 = vmatpush1.bf16.msra.mxu0 0
  %316 = vmatprep.subr.bf16.mxu0 0
  %317 = vmatpush1.bf16.msra.mxu0 0
  %318 = vmatprep.subr.bf16.mxu0 0
  %319 = vmatpush1.bf16.msra.mxu0 0
  %320 = vmatprep.subr.bf16.mxu0 0
  %321 = vmatpush1.bf16.msra.mxu0 0
  %322 = vmatprep.subr.bf16.mxu0 0
  %323 = vmatpush1.bf16.msra.mxu0 0
  %324 = vmatprep.subr.bf16.mxu0 0
  %325 = vmatpush1.bf16.msra.mxu0 0
  %326 = vmatprep.subr.bf16.mxu0 0
  %327 = vmatpush1.bf16.msra.mxu0 0
  %328 = vmatprep.subr.bf16.mxu0 0
  %329 = vmatpush1.bf16.msra.mxu0 0
  %330 = vmatprep.subr.bf16.mxu0 0
  %331 = vmatpush1.bf16.msra.mxu0 0
  %332 = vmatprep.subr.bf16.mxu0 0
  %333 = vmatpush1.bf16.msra.mxu0 0
  %334 = vmatprep.mubr.bf16.mxu0 0
  %335 = vmatmul.mubr.bf16.gmra.mrb[0].mxu0 %v156
  %v336 = vpop.f32.mrb[0].mxu0
  %v337 = vadd.f32 0.0, %v336
  %v338 = vpop.f32.mrb[0].mxu0
  %v339 = vpop.f32.mrb[0].mxu0
  %v340 = vadd.f32 0.0, %v339
  %v341 = vpop.f32.mrb[0].mxu0
  %342 = vmatprep.mubr.bf16.mxu0 0
  %343 = vmatmul.mubr.bf16.gmra.mrb[0].mxu0 %v159
  %v344 = vpop.f32.mrb[0].mxu0
  %v345 = vadd.f32 0.0, %v344
  %v346 = vpop.f32.mrb[0].mxu0
  %v347 = vpop.f32.mrb[0].mxu0
  %v348 = vadd.f32 0.0, %v347
  %v349 = vpop.f32.mrb[0].mxu0
  %350 = vmatprep.mubr.bf16.mxu0 0
  %351 = vmatmul.mubr.bf16.gmra.mrb[0].mxu0 %v162
  %v352 = vpop.f32.mrb[0].mxu0
  %v353 = vadd.f32 0.0, %v352
  %v354 = vpop.f32.mrb[0].mxu0
  %v355 = vpop.f32.mrb[0].mxu0
  %v356 = vadd.f32 0.0, %v355
  %v357 = vpop.f32.mrb[0].mxu0
  %358 = vmatprep.mubr.bf16.mxu0 0
  %359 = vmatmul.mubr.bf16.gmra.mrb[0].mxu0 %v165
  %v360 = vpop.f32.mrb[0].mxu0
  %v361 = vadd.f32 0.0, %v360
  %v362 = vpop.f32.mrb[0].mxu0
  %v363 = vpop.f32.mrb[0].mxu0
  %v364 = vadd.f32 0.0, %v363
  %v365 = vpop.f32.mrb[0].mxu0
  %366 = vmatprep.mubr.bf16.mxu0 0
  %367 = vmatmul.mubr.bf16.gmra.mrb[0].mxu0 %v168
  %v368 = vpop.f32.mrb[0].mxu0
  %v369 = vadd.f32 0.0, %v368
  %v370 = vpop.f32.mrb[0].mxu0
  %v371 = vpop.f32.mrb[0].mxu0
  %v372 = vadd.f32 0.0, %v371
  %v373 = vpop.f32.mrb[0].mxu0
  %374 = vmatprep.mubr.bf16.mxu0 0
  %375 = vmatmul.mubr.bf16.gmra.mrb[0].mxu0 %v171
  %v376 = vpop.f32.mrb[0].mxu0
  %v377 = vadd.f32 0.0, %v376
  %v378 = vpop.f32.mrb[0].mxu0
  %v379 = vpop.f32.mrb[0].mxu0
  %v380 = vadd.f32 0.0, %v379
  %v381 = vpop.f32.mrb[0].mxu0
  %382 = vmatprep.mubr.bf16.mxu0 0
  %383 = vmatmul.mubr.bf16.gmra.mrb[0].mxu0 %v174
  %v384 = vpop.f32.mrb[0].mxu0
  %v385 = vadd.f32 0.0, %v384
  %v386 = vpop.f32.mrb[0].mxu0
  %v387 = vpop.f32.mrb[0].mxu0
  %v388 = vadd.f32 0.0, %v387
  %v389 = vpop.f32.mrb[0].mxu0
  %390 = vmatprep.mubr.bf16.mxu0 0
  %391 = vmatmul.mubr.bf16.gmra.mrb[0].mxu0 %v177
  %v392 = vpop.f32.mrb[0].mxu0
  %v393 = vadd.f32 0.0, %v392
  %v394 = vpop.f32.mrb[0].mxu0
  %v395 = vpop.f32.mrb[0].mxu0
  %v396 = vadd.f32 0.0, %v395
  %v397 = vpop.f32.mrb[0].mxu0
  %398 = vdwg.mxu0
  %v399 = vmul.f32 %v224, -1.702
  %v400 = vmul.f32 %v226, -1.702
  %v401 = vmul.f32 %v337, -1.702
  %v402 = vmul.f32 %v228, -1.702
  %v403 = vmul.f32 %v230, -1.702
  %v404 = vmul.f32 %v340, -1.702
  %v405 = vmul.f32 %v234, -1.702
  %v406 = vmul.f32 %v236, -1.702
  %v407 = vmul.f32 %v345, -1.702
  %v408 = vmul.f32 %v238, -1.702
  %v409 = vmul.f32 %v240, -1.702
  %v410 = vmul.f32 %v348, -1.702
  %v411 = vmul.f32 %v244, -1.702
  %v412 = vmul.f32 %v246, -1.702
  %v413 = vmul.f32 %v353, -1.702
  %v414 = vmul.f32 %v248, -1.702
  %v415 = vmul.f32 %v250, -1.702
  %v416 = vmul.f32 %v356, -1.702
  %v417 = vmul.f32 %v254, -1.702
  %v418 = vmul.f32 %v256, -1.702
  %v419 = vmul.f32 %v361, -1.702
  %v420 = vmul.f32 %v258, -1.702
  %v421 = vmul.f32 %v260, -1.702
  %v422 = vmul.f32 %v364, -1.702
  %v423 = vmul.f32 %v264, -1.702
  %v424 = vmul.f32 %v266, -1.702
  %v425 = vmul.f32 %v369, -1.702
  %v426 = vmul.f32 %v268, -1.702
  %v427 = vmul.f32 %v270, -1.702
  %v428 = vmul.f32 %v372, -1.702
  %v429 = vmul.f32 %v274, -1.702
  %v430 = vmul.f32 %v276, -1.702
  %v431 = vmul.f32 %v377, -1.702
  %v432 = vmul.f32 %v278, -1.702
  %v433 = vmul.f32 %v280, -1.702
  %v434 = vmul.f32 %v380, -1.702
  %v435 = vmul.f32 %v284, -1.702
  %v436 = vmul.f32 %v286, -1.702
  %v437 = vmul.f32 %v385, -1.702
  %v438 = vmul.f32 %v288, -1.702
  %v439 = vmul.f32 %v290, -1.702
  %v440 = vmul.f32 %v388, -1.702
  %v441 = vmul.f32 %v294, -1.702
  %v442 = vmul.f32 %v296, -1.702
  %v443 = vmul.f32 %v393, -1.702
  %v444 = vmul.f32 %v298, -1.702
  %v445 = vmul.f32 %v300, -1.702
  %v446 = vmul.f32 %v396, -1.702
  %v447 = vmul.f32 %v399, 1.442695
  %v448 = vpow.pop %v447
  %v449 = vmul.f32 %v400, 1.442695
  %v450 = vpow.pop %v449
  %v451 = vmul.f32 %v401, 1.442695
  %v452 = vpow.pop %v451
  %v453 = vmul.f32 %v402, 1.442695
  %v454 = vpow.pop %v453
  %v455 = vmul.f32 %v403, 1.442695
  %v456 = vpow.pop %v455
  %v457 = vmul.f32 %v404, 1.442695
  %v458 = vpow.pop %v457
  %v459 = vmul.f32 %v405, 1.442695
  %v460 = vpow.pop %v459
  %v461 = vmul.f32 %v406, 1.442695
  %v462 = vpow.pop %v461
  %v463 = vmul.f32 %v407, 1.442695
  %v464 = vpow.pop %v463
  %v465 = vmul.f32 %v408, 1.442695
  %v466 = vpow.pop %v465
  %v467 = vmul.f32 %v409, 1.442695
  %v468 = vpow.pop %v467
  %v469 = vmul.f32 %v410, 1.442695
  %v470 = vpow.pop %v469
  %v471 = vmul.f32 %v411, 1.442695
  %v472 = vpow.pop %v471
  %v473 = vmul.f32 %v412, 1.442695
  %v474 = vpow.pop %v473
  %v475 = vmul.f32 %v413, 1.442695
  %v476 = vpow.pop %v475
  %v477 = vmul.f32 %v414, 1.442695
  %v478 = vpow.pop %v477
  %v479 = vmul.f32 %v415, 1.442695
  %v480 = vpow.pop %v479
  %v481 = vmul.f32 %v416, 1.442695
  %v482 = vpow.pop %v481
  %v483 = vmul.f32 %v417, 1.442695
  %v484 = vpow.pop %v483
  %v485 = vmul.f32 %v418, 1.442695
  %v486 = vpow.pop %v485
  %v487 = vmul.f32 %v419, 1.442695
  %v488 = vpow.pop %v487
  %v489 = vmul.f32 %v420, 1.442695
  %v490 = vpow.pop %v489
  %v491 = vmul.f32 %v421, 1.442695
  %v492 = vpow.pop %v491
  %v493 = vmul.f32 %v422, 1.442695
  %v494 = vpow.pop %v493
  %v495 = vmul.f32 %v423, 1.442695
  %v496 = vpow.pop %v495
  %v497 = vmul.f32 %v424, 1.442695
  %v498 = vpow.pop %v497
  %v499 = vmul.f32 %v425, 1.442695
  %v500 = vpow.pop %v499
  %v501 = vmul.f32 %v426, 1.442695
  %v502 = vpow.pop %v501
  %v503 = vmul.f32 %v427, 1.442695
  %v504 = vpow.pop %v503
  %v505 = vmul.f32 %v428, 1.442695
  %v506 = vpow.pop %v505
  %v507 = vmul.f32 %v429, 1.442695
  %v508 = vpow.pop %v507
  %v509 = vmul.f32 %v430, 1.442695
  %v510 = vpow.pop %v509
  %v511 = vmul.f32 %v431, 1.442695
  %v512 = vpow.pop %v511
  %v513 = vmul.f32 %v432, 1.442695
  %v514 = vpow.pop %v513
  %v515 = vmul.f32 %v433, 1.442695
  %v516 = vpow.pop %v515
  %v517 = vmul.f32 %v434, 1.442695
  %v518 = vpow.pop %v517
  %v519 = vmul.f32 %v435, 1.442695
  %v520 = vpow.pop %v519
  %v521 = vmul.f32 %v436, 1.442695
  %v522 = vpow.pop %v521
  %v523 = vmul.f32 %v437, 1.442695
  %v524 = vpow.pop %v523
  %v525 = vmul.f32 %v438, 1.442695
  %v526 = vpow.pop %v525
  %v527 = vmul.f32 %v439, 1.442695
  %v528 = vpow.pop %v527
  %v529 = vmul.f32 %v440, 1.442695
  %v530 = vpow.pop %v529
  %v531 = vmul.f32 %v441, 1.442695
  %v532 = vpow.pop %v531
  %v533 = vmul.f32 %v442, 1.442695
  %v534 = vpow.pop %v533
  %v535 = vmul.f32 %v443, 1.442695
  %v536 = vpow.pop %v535
  %v537 = vmul.f32 %v444, 1.442695
  %v538 = vpow.pop %v537
  %v539 = vmul.f32 %v445, 1.442695
  %v540 = vpow.pop %v539
  %v541 = vmul.f32 %v446, 1.442695
  %v542 = vpow.pop %v541
  %v543 = vadd.f32 %v448, 1.0
  %v544 = vadd.f32 %v450, 1.0
  %v545 = vadd.f32 %v452, 1.0
  %v546 = vadd.f32 %v454, 1.0
  %v547 = vadd.f32 %v456, 1.0
  %v548 = vadd.f32 %v458, 1.0
  %v549 = vadd.f32 %v460, 1.0
  %v550 = vadd.f32 %v462, 1.0
  %v551 = vadd.f32 %v464, 1.0
  %v552 = vadd.f32 %v466, 1.0
  %v553 = vadd.f32 %v468, 1.0
  %v554 = vadd.f32 %v470, 1.0
  %v555 = vadd.f32 %v472, 1.0
  %v556 = vadd.f32 %v474, 1.0
  %v557 = vadd.f32 %v476, 1.0
  %v558 = vadd.f32 %v478, 1.0
  %v559 = vadd.f32 %v480, 1.0
  %v560 = vadd.f32 %v482, 1.0
  %v561 = vadd.f32 %v484, 1.0
  %v562 = vadd.f32 %v486, 1.0
  %v563 = vadd.f32 %v488, 1.0
  %v564 = vadd.f32 %v490, 1.0
  %v565 = vadd.f32 %v492, 1.0
  %v566 = vadd.f32 %v494, 1.0
  %v567 = vadd.f32 %v496, 1.0
  %v568 = vadd.f32 %v498, 1.0
  %v569 = vadd.f32 %v500, 1.0
  %v570 = vadd.f32 %v502, 1.0
  %v571 = vadd.f32 %v504, 1.0
  %v572 = vadd.f32 %v506, 1.0
  %v573 = vadd.f32 %v508, 1.0
  %v574 = vadd.f32 %v510, 1.0
  %v575 = vadd.f32 %v512, 1.0
  %v576 = vadd.f32 %v514, 1.0
  %v577 = vadd.f32 %v516, 1.0
  %v578 = vadd.f32 %v518, 1.0
  %v579 = vadd.f32 %v520, 1.0
  %v580 = vadd.f32 %v522, 1.0
  %v581 = vadd.f32 %v524, 1.0
  %v582 = vadd.f32 %v526, 1.0
  %v583 = vadd.f32 %v528, 1.0
  %v584 = vadd.f32 %v530, 1.0
  %v585 = vadd.f32 %v532, 1.0
  %v586 = vadd.f32 %v534, 1.0
  %v587 = vadd.f32 %v536, 1.0
  %v588 = vadd.f32 %v538, 1.0
  %v589 = vadd.f32 %v540, 1.0
  %v590 = vadd.f32 %v542, 1.0
  %v591 = vrcp.pop %v543
  %v592 = vrcp.pop %v544
  %v593 = vrcp.pop %v545
  %v594 = vrcp.pop %v546
  %v595 = vrcp.pop %v547
  %v596 = vrcp.pop %v548
  %v597 = vrcp.pop %v549
  %v598 = vrcp.pop %v550
  %v599 = vrcp.pop %v551
  %v600 = vrcp.pop %v552
  %v601 = vrcp.pop %v553
  %v602 = vrcp.pop %v554
  %v603 = vrcp.pop %v555
  %v604 = vrcp.pop %v556
  %v605 = vrcp.pop %v557
  %v606 = vrcp.pop %v558
  %v607 = vrcp.pop %v559
  %v608 = vrcp.pop %v560
  %v609 = vrcp.pop %v561
  %v610 = vrcp.pop %v562
  %v611 = vrcp.pop %v563
  %v612 = vrcp.pop %v564
  %v613 = vrcp.pop %v565
  %v614 = vrcp.pop %v566
  %v615 = vrcp.pop %v567
  %v616 = vrcp.pop %v568
  %v617 = vrcp.pop %v569
  %v618 = vrcp.pop %v570
  %v619 = vrcp.pop %v571
  %v620 = vrcp.pop %v572
  %v621 = vrcp.pop %v573
  %v622 = vrcp.pop %v574
  %v623 = vrcp.pop %v575
  %v624 = vrcp.pop %v576
  %v625 = vrcp.pop %v577
  %v626 = vrcp.pop %v578
  %v627 = vrcp.pop %v579
  %v628 = vrcp.pop %v580
  %v629 = vrcp.pop %v581
  %v630 = vrcp.pop %v582
  %v631 = vrcp.pop %v583
  %v632 = vrcp.pop %v584
  %v633 = vrcp.pop %v585
  %v634 = vrcp.pop %v586
  %v635 = vrcp.pop %v587
  %v636 = vrcp.pop %v588
  %v637 = vrcp.pop %v589
  %v638 = vrcp.pop %v590
  %v639 = vmul.f32 %v224, %v591
  %v640 = vmul.f32 %v226, %v592
  %v641 = vmul.f32 %v337, %v593
  %v642 = vmul.f32 %v228, %v594
  %v643 = vmul.f32 %v230, %v595
  %v644 = vmul.f32 %v340, %v596
  %v645 = vmul.f32 %v234, %v597
  %v646 = vmul.f32 %v236, %v598
  %v647 = vmul.f32 %v345, %v599
  %v648 = vmul.f32 %v238, %v600
  %v649 = vmul.f32 %v240, %v601
  %v650 = vmul.f32 %v348, %v602
  %v651 = vmul.f32 %v244, %v603
  %v652 = vmul.f32 %v246, %v604
  %v653 = vmul.f32 %v353, %v605
  %v654 = vmul.f32 %v248, %v606
  %v655 = vmul.f32 %v250, %v607
  %v656 = vmul.f32 %v356, %v608
  %v657 = vmul.f32 %v254, %v609
  %v658 = vmul.f32 %v256, %v610
  %v659 = vmul.f32 %v361, %v611
  %v660 = vmul.f32 %v258, %v612
  %v661 = vmul.f32 %v260, %v613
  %v662 = vmul.f32 %v364, %v614
  %v663 = vmul.f32 %v264, %v615
  %v664 = vmul.f32 %v266, %v616
  %v665 = vmul.f32 %v369, %v617
  %v666 = vmul.f32 %v268, %v618
  %v667 = vmul.f32 %v270, %v619
  %v668 = vmul.f32 %v372, %v620
  %v669 = vmul.f32 %v274, %v621
  %v670 = vmul.f32 %v276, %v622
  %v671 = vmul.f32 %v377, %v623
  %v672 = vmul.f32 %v278, %v624
  %v673 = vmul.f32 %v280, %v625
  %v674 = vmul.f32 %v380, %v626
  %v675 = vmul.f32 %v284, %v627
  %v676 = vmul.f32 %v286, %v628
  %v677 = vmul.f32 %v385, %v629
  %v678 = vmul.f32 %v288, %v630
  %v679 = vmul.f32 %v290, %v631
  %v680 = vmul.f32 %v388, %v632
  %v681 = vmul.f32 %v294, %v633
  %v682 = vmul.f32 %v296, %v634
  %v683 = vmul.f32 %v393, %v635
  %v684 = vmul.f32 %v298, %v636
  %v685 = vmul.f32 %v300, %v637
  %v686 = vmul.f32 %v396, %v638
  %v687 = vld [vmem:[#allocation2] sm:$0x3f]
  %v688 = vadd.f32 %v639, %v642
  %v689 = vadd.f32 %v688, %v645
  %v690 = vadd.f32 %v689, %v648
  %v691 = vadd.f32 %v690, %v651
  %v692 = vadd.f32 %v691, %v654
  %v693 = vadd.f32 %v692, %v657
  %v694 = vadd.f32 %v693, %v660
  %v695 = vrot.slane %v694, 4
  %v696 = vadd.f32 %v694, %v695
  %v697 = vrot.slane %v696, 2
  %v698 = vadd.f32 %v696, %v697
  %v699 = vrot.slane %v698, 1
  %v700 = vadd.f32 %v698, %v699
  %v701 = vadd.f32 %v640, %v643
  %v702 = vadd.f32 %v701, %v646
  %v703 = vadd.f32 %v702, %v649
  %v704 = vadd.f32 %v703, %v652
  %v705 = vadd.f32 %v704, %v655
  %v706 = vadd.f32 %v705, %v658
  %v707 = vadd.f32 %v706, %v661
  %v708 = vrot.slane %v707, 4
  %v709 = vadd.f32 %v707, %v708
  %v710 = vrot.slane %v709, 2
  %v711 = vadd.f32 %v709, %v710
  %v712 = vrot.slane %v711, 1
  %v713 = vadd.f32 %v711, %v712
  %vm714 = vcmask 523264
  %v715 = vsel %vm714, %v641, 0.0
  %v716 = vsel %vm714, %v644, 0.0
  %v717 = vadd.f32 %v715, %v716
  %v718 = vsel %vm714, %v647, 0.0
  %v719 = vadd.f32 %v717, %v718
  %v720 = vsel %vm714, %v650, 0.0
  %v721 = vadd.f32 %v719, %v720
  %v722 = vsel %vm714, %v653, 0.0
  %v723 = vadd.f32 %v721, %v722
  %v724 = vsel %vm714, %v656, 0.0
  %v725 = vadd.f32 %v723, %v724
  %v726 = vsel %vm714, %v659, 0.0
  %v727 = vadd.f32 %v725, %v726
  %v728 = vsel %vm714, %v662, 0.0
  %v729 = vadd.f32 %v727, %v728
  %v730 = vrot.slane %v729, 4
  %v731 = vadd.f32 %v729, %v730
  %v732 = vrot.slane %v731, 2
  %v733 = vadd.f32 %v731, %v732
  %v734 = vrot.slane %v733, 1
  %v735 = vadd.f32 %v733, %v734
  %v736 = vadd.f32 %v663, %v666
  %v737 = vadd.f32 %v736, %v669
  %v738 = vadd.f32 %v737, %v672
  %v739 = vadd.f32 %v738, %v675
  %v740 = vadd.f32 %v739, %v678
  %v741 = vadd.f32 %v740, %v681
  %v742 = vadd.f32 %v741, %v684
  %v743 = vrot.slane %v742, 4
  %v744 = vadd.f32 %v742, %v743
  %v745 = vrot.slane %v744, 2
  %v746 = vadd.f32 %v744, %v745
  %v747 = vrot.slane %v746, 1
  %v748 = vadd.f32 %v746, %v747
  %v749 = vadd.f32 %v664, %v667
  %v750 = vadd.f32 %v749, %v670
  %v751 = vadd.f32 %v750, %v673
  %v752 = vadd.f32 %v751, %v676
  %v753 = vadd.f32 %v752, %v679
  %v754 = vadd.f32 %v753, %v682
  %v755 = vadd.f32 %v754, %v685
  %v756 = vrot.slane %v755, 4
  %v757 = vadd.f32 %v755, %v756
  %v758 = vrot.slane %v757, 2
  %v759 = vadd.f32 %v757, %v758
  %v760 = vrot.slane %v759, 1
  %v761 = vadd.f32 %v759, %v760
  %v762 = vsel %vm714, %v665, 0.0
  %v763 = vsel %vm714, %v668, 0.0
  %v764 = vadd.f32 %v762, %v763
  %v765 = vsel %vm714, %v671, 0.0
  %v766 = vadd.f32 %v764, %v765
  %v767 = vsel %vm714, %v674, 0.0
  %v768 = vadd.f32 %v766, %v767
  %v769 = vsel %vm714, %v677, 0.0
  %v770 = vadd.f32 %v768, %v769
  %v771 = vsel %vm714, %v680, 0.0
  %v772 = vadd.f32 %v770, %v771
  %v773 = vsel %vm714, %v683, 0.0
  %v774 = vadd.f32 %v772, %v773
  %v775 = vsel %vm714, %v686, 0.0
  %v776 = vadd.f32 %v774, %v775
  %v777 = vrot.slane %v776, 4
  %v778 = vadd.f32 %v776, %v777
  %v779 = vrot.slane %v778, 2
  %v780 = vadd.f32 %v778, %v779
  %v781 = vrot.slane %v780, 1
  %v782 = vadd.f32 %v780, %v781
  %v789 = vcombine.low %v700, %v713
  %v791 = vunpack.c.l.s4 1983009808
  %v792 = vunpack.c.0.s8 %v791
  %v793 = vlaneseq
  %v794 = vshrl.u32 %v793, 7
  %v795 = vsub.s32 %v792, %v794
  %v796 = vrot.slane %v789, %v795
  %v798 = vunpack.c.l.s4 1983009808
  %v799 = vunpack.c.0.s8 %v798
  %v800 = vlaneseq
  %v801 = vshrl.u32 %v800, 7
  %v802 = vsub.s32 %v799, %v801
  %v803 = vrot.slane %v735, %v802
  %v804 = vcombine.low %v796, %v803
  %v805 = vcombine.low %v748, %v761
  %v807 = vunpack.c.l.s4 1983009808
  %v808 = vunpack.c.0.s8 %v807
  %v809 = vlaneseq
  %v810 = vshrl.u32 %v809, 7
  %v811 = vsub.s32 %v808, %v810
  %v812 = vrot.slane %v805, %v811
  %v814 = vunpack.c.l.s4 1983009808
  %v815 = vunpack.c.0.s8 %v814
  %v816 = vlaneseq
  %v817 = vshrl.u32 %v816, 7
  %v818 = vsub.s32 %v815, %v817
  %v819 = vrot.slane %v782, %v818
  %v820 = vcombine.low %v812, %v819
  %vm821 = vcmask 1044484
  %v822 = vsel %vm821, %v804, %v804
  %vm823 = vcmask 1046534
  %v824 = vsel %vm823, %v804, %v822
  %v825 = vrot.slane %v820, 7
  %vm826 = vcmask 1041409
  %v827 = vsel %vm826, %v825, %v824
  %vm828 = vcmask 1043459
  %v829 = vsel %vm828, %v825, %v827
  %vm830 = vcmask 1045509
  %v831 = vsel %vm830, %v825, %v829
  %vm832 = vcmask 1047559
  %v833 = vsel %vm832, %v825, %v831
  %v835 = vadd.f32 %v687, %v833
  %vm836 = vcmask 1041408
  %vm837 = vcmask 1043458
  %vm838 = vmor %vm837, %vm836
  %vm839 = vcmask 521220
  %vm840 = vmor %vm839, %vm838
  %841 = vst.msk [vmem:[#allocation2] sm:$0x3f] %vm840, %v835
  // Predicated region
  $region22: #{tiny_vit_forward.1} parent=0 // pred_check
    %p842 = pneg %p18
  $region23: #{tiny_vit_forward.1} parent=0 // pred_check_branch
    %844 = sbr.rel (%p842) target = $region25
  $region24: #{tiny_vit_forward.1} parent=0 // pred_region
    %v845 = vld [vmem:[#allocation2] sm:$0x3f]
    %v846 = vmul.f32 %v845, 0.015625
    %v847 = vld [vmem:[%s2] sm:$0xff]
    %v848 = vld [vmem:[%s2 + $0x8] sm:$0xff]
    %v849 = vld [vmem:[%s2 + $0x10] sm:$0xff]
    %v850 = vld [vmem:[%s2 + $0x18] sm:$0xff]
    %v851 = vld [vmem:[%s2 + $0x20] sm:$0xff]
    %v852 = vld [vmem:[%s2 + $0x28] sm:$0xff]
    %v853 = vld [vmem:[%s2 + $0x30] sm:$0xff]
    %v854 = vld [vmem:[%s2 + $0x38] sm:$0xff]
    %v855 = vld [vmem:[%s2 + $0x40] sm:$0xff]
    %v856 = vld [vmem:[%s2 + $0x48] sm:$0xff]
    %v857 = vld [vmem:[%s2 + $0x50] sm:$0xff]
    %v858 = vld [vmem:[%s2 + $0x58] sm:$0xff]
    %v859 = vld [vmem:[%s2 + $0x60] sm:$0xff]
    %v860 = vld [vmem:[%s2 + $0x68] sm:$0xff]
    %v861 = vld [vmem:[%s2 + $0x70] sm:$0xff]
    %v862 = vld [vmem:[%s2 + $0x78] sm:$0xff]
    %v863 = vld [vmem:[%s2 + $0x80] sm:$0xff]
    %v864 = vld [vmem:[%s2 + $0x88] sm:$0xff]
    %v865 = vld [vmem:[%s2 + $0x90] sm:$0xff]
    %v866 = vld [vmem:[%s2 + $0x98] sm:$0xff]
    %v867 = vld [vmem:[%s2 + $0xa0] sm:$0xff]
    %v868 = vld [vmem:[%s2 + $0xa8] sm:$0xff]
    %v869 = vld [vmem:[%s2 + $0xb0] sm:$0xff]
    %v870 = vld [vmem:[%s2 + $0xb8] sm:$0xff]
    %v871 = vld [vmem:[%s2 + $0xc0] sm:$0xff]
    %v872 = vld [vmem:[%s2 + $0xc8] sm:$0xff]
    %v873 = vld [vmem:[%s2 + $0xd0] sm:$0xff]
    %v874 = vld [vmem:[%s2 + $0xd8] sm:$0xff]
    %v875 = vld [vmem:[%s2 + $0xe0] sm:$0xff]
    %v876 = vld [vmem:[%s2 + $0xe8] sm:$0xff]
    %v877 = vld [vmem:[%s2 + $0xf0] sm:$0xff]
    %v878 = vld [vmem:[%s2 + $0xf8] sm:$0xff]
    %v879 = vld [vmem:[%s2 + $0x100] sm:$0xff]
    %v880 = vld [vmem:[%s2 + $0x108] sm:$0xff]
    %v881 = vld [vmem:[%s2 + $0x110] sm:$0xff]
    %v882 = vld [vmem:[%s2 + $0x118] sm:$0xff]
    %v883 = vld [vmem:[%s2 + $0x120] sm:$0xff]
    %v884 = vld [vmem:[%s2 + $0x128] sm:$0xff]
    %v885 = vld [vmem:[%s2 + $0x130] sm:$0xff]
    %v886 = vld [vmem:[%s2 + $0x138] sm:$0xff]
    %v887 = vld [vmem:[%s3] sm:$0x1]
    %v889 = vlaneseq
    %v890 = vshrl.u32 %v889, 7
    %v891 = vsub.s32 0, %v890
    %v892 = vrot.slane %v887, %v891
    %v895 = vcombine.high %v846, %v846
    %v897 = vunpack.c.l.s4 1983009808
    %v898 = vunpack.c.0.s8 %v897
    %v899 = vlaneseq
    %v900 = vshrl.u32 %v899, 7
    %v901 = vsub.s32 %v898, %v900
    %v902 = vrot.slane %v846, %v901
    %v904 = vunpack.c.l.s4 1983009808
    %v905 = vunpack.c.0.s8 %v904
    %v906 = vlaneseq
    %v907 = vshrl.u32 %v906, 7
    %v908 = vsub.s32 %v905, %v907
    %v909 = vrot.slane %v895, %v908
    %v910 = vcombine.high %v902, %v902
    %v913 = vsel %vm714, %v909, 0
    %915 = vmatprep.subr.mxu0 0.0
    %916 = vmatpush1.msra.mxu0 %v847
    %917 = vmatprep.subr.mxu0 0.0
    %918 = vmatpush1.msra.mxu0 %v848
    %919 = vmatprep.subr.mxu0 0.0
    %920 = vmatpush1.msra.mxu0 %v849
    %921 = vmatprep.subr.mxu0 0.0
    %922 = vmatpush1.msra.mxu0 %v850
    %923 = vmatprep.subr.mxu0 0.0
    %924 = vmatpush1.msra.mxu0 %v851
    %925 = vmatprep.subr.mxu0 0.0
    %926 = vmatpush1.msra.mxu0 %v852
    %927 = vmatprep.subr.mxu0 0.0
    %928 = vmatpush1.msra.mxu0 %v853
    %929 = vmatprep.subr.mxu0 0.0
    %930 = vmatpush1.msra.mxu0 %v854
    %931 = vmatprep.subr.mxu0 0.0
    %932 = vmatpush1.msra.mxu0 %v855
    %933 = vmatprep.subr.mxu0 0.0
    %934 = vmatpush1.msra.mxu0 %v856
    %935 = vmatprep.subr.mxu0 0.0
    %936 = vmatpush1.msra.mxu0 %v857
    %937 = vmatprep.subr.mxu0 0.0
    %938 = vmatpush1.msra.mxu0 %v858
    %939 = vmatprep.subr.mxu0 0.0
    %940 = vmatpush1.msra.mxu0 %v859
    %941 = vmatprep.subr.mxu0 0.0
    %942 = vmatpush1.msra.mxu0 %v860
    %943 = vmatprep.subr.mxu0 0.0
    %944 = vmatpush1.msra.mxu0 %v861
    %945 = vmatprep.subr.mxu0 0.0
    %946 = vmatpush1.msra.mxu0 %v862
    %947 = vmatprep.subr.mxu0 0.0
    %948 = vmatpush1.msra.mxu0 %v863
    %949 = vmatprep.subr.mxu0 0.0
    %950 = vmatpush1.msra.mxu0 %v864
    %951 = vmatprep.subr.mxu0 0.0
    %952 = vmatpush1.msra.mxu0 %v865
    %953 = vmatprep.subr.mxu0 0.0
    %954 = vmatpush1.msra.mxu0 %v866
    %955 = vmatprep.subr.mxu0 0.0
    %956 = vmatpush1.msra.mxu0 %v867
    %957 = vmatprep.subr.mxu0 0.0
    %958 = vmatpush1.msra.mxu0 %v868
    %959 = vmatprep.subr.mxu0 0.0
    %960 = vmatpush1.msra.mxu0 %v869
    %961 = vmatprep.subr.mxu0 0.0
    %962 = vmatpush1.msra.mxu0 %v870
    %963 = vmatprep.subr.mxu0 0.0
    %964 = vmatpush1.msra.mxu0 %v871
    %965 = vmatprep.subr.mxu0 0.0
    %966 = vmatpush1.msra.mxu0 %v872
    %967 = vmatprep.subr.mxu0 0.0
    %968 = vmatpush1.msra.mxu0 %v873
    %969 = vmatprep.subr.mxu0 0.0
    %970 = vmatpush1.msra.mxu0 %v874
    %971 = vmatprep.subr.mxu0 0.0
    %972 = vmatpush1.msra.mxu0 %v875
    %973 = vmatprep.subr.mxu0 0.0
    %974 = vmatpush1.msra.mxu0 %v876
    %975 = vmatprep.subr.mxu0 0.0
    %976 = vmatpush1.msra.mxu0 %v877
    %977 = vmatprep.subr.mxu0 0.0
    %978 = vmatpush1.msra.mxu0 %v878
    %979 = vmatprep.mubr.f32.mxu0 %v910
    %980 = vmatmul.mubr.f32.gmra.mrb[0].mxu0 %v902
    %v981 = vpop.f32.mrb[0].mxu0
    %v982 = vadd.f32 %v892, %v981
    %v983 = vpop.f32.mrb[0].mxu0
    %984 = vdwg.mxu0
    %985 = vmatprep.subr.mxu0 0.0
    %986 = vmatpush1.msra.mxu0 %v879
    %987 = vmatprep.subr.mxu0 0.0
    %988 = vmatpush1.msra.mxu0 %v880
    %989 = vmatprep.subr.mxu0 0.0
    %990 = vmatpush1.msra.mxu0 %v881
    %991 = vmatprep.subr.mxu0 0.0
    %992 = vmatpush1.msra.mxu0 %v882
    %993 = vmatprep.subr.mxu0 0.0
    %994 = vmatpush1.msra.mxu0 %v883
    %995 = vmatprep.subr.mxu0 0.0
    %996 = vmatpush1.msra.mxu0 %v884
    %997 = vmatprep.subr.mxu0 0.0
    %998 = vmatpush1.msra.mxu0 %v885
    %999 = vmatprep.subr.mxu0 0.0
    %1000 = vmatpush1.msra.mxu0 %v886
    %1001 = vmatprep.subr.mxu0 0.0
    %1002 = vmatpush1.msra.mxu0 0.0
    %1003 = vmatprep.subr.mxu0 0.0
    %1004 = vmatpush1.msra.mxu0 0.0
    %1005 = vmatprep.subr.mxu0 0.0
    %1006 = vmatpush1.msra.mxu0 0.0
    %1007 = vmatprep.subr.mxu0 0.0
    %1008 = vmatpush1.msra.mxu0 0.0
    %1009 = vmatprep.subr.mxu0 0.0
    %1010 = vmatpush1.msra.mxu0 0.0
    %1011 = vmatprep.subr.mxu0 0.0
    %1012 = vmatpush1.msra.mxu0 0.0
    %1013 = vmatprep.subr.mxu0 0.0
    %1014 = vmatpush1.msra.mxu0 0.0
    %1015 = vmatprep.subr.mxu0 0.0
    %1016 = vmatpush1.msra.mxu0 0.0
    %1017 = vmatprep.subr.mxu0 0.0
    %1018 = vmatpush1.msra.mxu0 0.0
    %1019 = vmatprep.subr.mxu0 0.0
    %1020 = vmatpush1.msra.mxu0 0.0
    %1021 = vmatprep.subr.mxu0 0.0
    %1022 = vmatpush1.msra.mxu0 0.0
    %1023 = vmatprep.subr.mxu0 0.0
    %1024 = vmatpush1.msra.mxu0 0.0
    %1025 = vmatprep.subr.mxu0 0.0
    %1026 = vmatpush1.msra.mxu0 0.0
    %1027 = vmatprep.subr.mxu0 0.0
    %1028 = vmatpush1.msra.mxu0 0.0
    %1029 = vmatprep.subr.mxu0 0.0
    %1030 = vmatpush1.msra.mxu0 0.0
    %1031 = vmatprep.subr.mxu0 0.0
    %1032 = vmatpush1.msra.mxu0 0.0
    %1033 = vmatprep.subr.mxu0 0.0
    %1034 = vmatpush1.msra.mxu0 0.0
    %1035 = vmatprep.subr.mxu0 0.0
    %1036 = vmatpush1.msra.mxu0 0.0
    %1037 = vmatprep.subr.mxu0 0.0
    %1038 = vmatpush1.msra.mxu0 0.0
    %1039 = vmatprep.subr.mxu0 0.0
    %1040 = vmatpush1.msra.mxu0 0.0
    %1041 = vmatprep.subr.mxu0 0.0
    %1042 = vmatpush1.msra.mxu0 0.0
    %1043 = vmatprep.subr.mxu0 0.0
    %1044 = vmatpush1.msra.mxu0 0.0
    %1045 = vmatprep.subr.mxu0 0.0
    %1046 = vmatpush1.msra.mxu0 0.0
    %1047 = vmatprep.subr.mxu0 0.0
    %1048 = vmatpush1.msra.mxu0 0.0
    %1049 = vmatprep.mubr.f32.mxu0 0.0
    %1050 = vmatmul.mubr.f32.gmra.mrb[0].mxu0 %v913
    %v1051 = vpop.f32.mrb[0].mxu0
    %v1052 = vadd.f32 %v982, %v1051
    %v1053 = vpop.f32.mrb[0].mxu0
    %1054 = vdwg.mxu0
    %1055 = vst [vmem:[%s4] sm:$0x3] %v1052
  $region25: #{tiny_vit_forward.1} parent=0 // pred_fallthru
    _
  // Predicated region
  $region26: #{tiny_vit_forward.1} parent=0 // pred_check
    _
  $region27: #{tiny_vit_forward.1} parent=0 // pred_check_branch
    %1057 = sbr.rel (0) target = $region29
  $region28: #{tiny_vit_forward.1} parent=0 // pred_region
    _
  $region29: #{tiny_vit_forward.1} parent=0 // pred_fallthru
    _
  // Predicated region
  $region30: #{tiny_vit_forward.1} parent=0 // pred_check
    _
  $region31: #{tiny_vit_forward.1} parent=0 // pred_check_branch
    %1059 = sbr.rel (0) target = $region33
  $region32: #{tiny_vit_forward.1} parent=0 // pred_region
    _
  $region33: #{tiny_vit_forward.1} parent=0 // pred_fallthru
    _

</llo_original>
